<compile_context>
chip_gen: v6e
topology: v6e:2x2x1
jax: 0.10.0
libtpu: 0.0.40
codegen_flags: <defaults>
</compile_context>

<pallas_src>
import jax
import jax.numpy as jnp
from jax.experimental import pallas as pl
from jax.experimental.pallas import tpu as pltpu


def mlpq_kernel(obsT_ref, actT_ref, w1oT_ref, w1aT_ref, b1t_ref,
                w2T_ref, b2t_ref, w3t_ref, b3_ref, o_ref):
    # Layer 1, concat fused:  W1^T @ [obs; act]^T == W1o^T @ obsT + W1a^T @ actT
    # All activations are feature-major (H, block_b): batch on the lane axis.
    h1 = jnp.tanh(
        jnp.dot(w1oT_ref[...], obsT_ref[...], preferred_element_type=jnp.float32)
        + jnp.dot(w1aT_ref[...], actT_ref[...], preferred_element_type=jnp.float32)
        + b1t_ref[...]
    )
    # Layer 2 (H -> H) on the MXU, still feature-major.
    h2 = jnp.tanh(
        jnp.dot(w2T_ref[...], h1, preferred_element_type=jnp.float32) + b2t_ref[...]
    )
    # Layer 3 (H -> 1): (1, H) @ (H, block_b) -> (1, block_b), lane-dense output,
    # full-lane contiguous store / DMA. No transpose needed anywhere.
    q = jnp.dot(w3t_ref[...], h2, preferred_element_type=jnp.float32) + b3_ref[...]
    o_ref[...] = q.astype(o_ref.dtype)


def init_mlpq_params(key, obs_dim, act_dim, hidden_sizes, stack=2):
    """Replicates the layer-size logic of rlbase `mlp()` and inits like nn.Linear."""
    hidden_layers = list(hidden_sizes) + [1]
    if len(hidden_layers[:-1]) < stack:
        hidden_layers[:-1] = hidden_layers[:-1] * stack  # same in-place slice trick
    dims = [obs_dim + act_dim] + hidden_layers
    params = []
    for i in range(len(dims) - 1):
        fan_in, fan_out = dims[i], dims[i + 1]
        key, kw, kb = jax.random.split(key, 3)
        bound = 1.0 / float(fan_in) ** 0.5  # PyTorch default U(-1/sqrt(fan_in), ...)
        w = jax.random.uniform(kw, (fan_in, fan_out), jnp.float32, -bound, bound)
        b = jax.random.uniform(kb, (1, fan_out), jnp.float32, -bound, bound)
        params += [w, b]
    assert len(params) == 6, "kernel is specialized for the 3-linear-layer MLPQ"
    return params


def _round_up(n, m):
    return (n + m - 1) // m * m


def mlpq_forward(obs, act, params, block_b=8192):
    obs = obs.astype(jnp.float32)
    act = act.astype(jnp.float32)
    w1, b1, w2, b2, w3, b3 = params

    B, obs_dim = obs.shape
    act_dim = act.shape[1]
    H = w1.shape[1]

    # Tiny, one-time param reshuffles (outside the hot loop), feature-major:
    w1oT = w1[:obs_dim].T            # (H, obs_dim)
    w1aT = w1[obs_dim:].T            # (H, act_dim)
    b1t = b1.reshape(H, 1)           # (H, 1) — single lane-broadcast in-kernel
    w2T = w2.T                       # (H, H)
    b2t = b2.reshape(H, 1)           # (H, 1)
    w3t = w3.T                       # (1, H)
    b3r = b3.reshape(1, 1)           # (1, 1)

    # Batch tiling (batch lives on the 128-lane axis):
    #   * right-size block_b so padding waste stays < 128 rows per block,
    #   * give the parallel axis >= 2 steps when there is enough work so both
    #     v7x TensorCores participate (harmless on 1-TC v5e/v6e).
    b_pad128 = _round_up(max(B, 1), 128)
    num_blocks = max(1, pl.cdiv(b_pad128, block_b))
    if b_pad128 >= 256:
        num_blocks = max(num_blocks, 2)
    block_b = _round_up(pl.cdiv(b_pad128, num_blocks), 128)
    b_pad = num_blocks * block_b

    obsT = obs.T                     # (obs_dim, B)
    actT = act.T                     # (act_dim, B)
    if b_pad != B:
        pad = ((0, 0), (0, b_pad - B))
        obsT = jnp.pad(obsT, pad)    # padded cols produce garbage q, sliced off below
        actT = jnp.pad(actT, pad)

    def resident(a):
        # Weights/biases: full-array block, constant index_map -> stay in VMEM
        # across all grid steps.
        return pl.BlockSpec(a.shape, lambda i: (0,) * a.ndim)

    out = pl.pallas_call(
        mlpq_kernel,
        out_shape=jax.ShapeDtypeStruct((1, b_pad), jnp.float32),
        grid=(num_blocks,),
        in_specs=[
            pl.BlockSpec((obs_dim, block_b), lambda i: (0, i)),
            pl.BlockSpec((act_dim, block_b), lambda i: (0, i)),
            resident(w1oT), resident(w1aT), resident(b1t),
            resident(w2T), resident(b2t), resident(w3t), resident(b3r),
        ],
        out_specs=pl.BlockSpec((1, block_b), lambda i: (0, i)),
        compiler_params=pltpu.CompilerParams(
            dimension_semantics=("parallel",)),
    )(obsT, actT, w1oT, w1aT, b1t, w2T, b2t, w3t, b3r)

    return out[0, :B]  # matches torch .squeeze(-1) -> shape (B,)


def mlpq_reference(obs, act, params):
    """Pure-JAX reference for a correctness check."""
    x = jnp.concatenate([obs, act], axis=-1).astype(jnp.float32)
    w1, b1, w2, b2, w3, b3 = params
    h1 = jnp.tanh(x @ w1 + b1)
    h2 = jnp.tanh(h1 @ w2 + b2)
    return (h2 @ w3 + b3).squeeze(-1)


if __name__ == "__main__":
    key = jax.random.PRNGKey(0)
    k_obs, k_act, k_par = jax.random.split(key, 3)

    obs_dim, act_dim = 11, 3
    hidden_sizes = [32]  # mlp() expands this to two hidden layers of 32
    params = init_mlpq_params(k_par, obs_dim, act_dim, hidden_sizes)

    # Small single-block case.
    batch = 8
    obs = jax.random.normal(k_obs, (batch, obs_dim), dtype=jnp.float32)
    act = jax.random.normal(k_act, (batch, act_dim), dtype=jnp.float32)

    q = mlpq_forward(obs, act, params)
    jax.block_until_ready(q)
    q_ref = mlpq_reference(obs, act, params)
    assert q.shape == (batch,), q.shape
    assert jnp.allclose(q, q_ref, atol=1e-5, rtol=1e-5), (q, q_ref)

    # Multi-block + padding case (exercises the batch-tiled grid path).
    batch2 = 300
    k_obs2, k_act2 = jax.random.split(jax.random.PRNGKey(1))
    obs2 = jax.random.normal(k_obs2, (batch2, obs_dim), dtype=jnp.float32)
    act2 = jax.random.normal(k_act2, (batch2, act_dim), dtype=jnp.float32)

    q2 = mlpq_forward(obs2, act2, params, block_b=128)
    jax.block_until_ready(q2)
    q2_ref = mlpq_reference(obs2, act2, params)
    assert q2.shape == (batch2,), q2.shape
    assert jnp.allclose(q2, q2_ref, atol=1e-5, rtol=1e-5)

    # Awkward-B case with the default (large) block_b: exercises the
    # right-sized tiling + >=2-block split path.
    batch3 = 520
    k_obs3, k_act3 = jax.random.split(jax.random.PRNGKey(2))
    obs3 = jax.random.normal(k_obs3, (batch3, obs_dim), dtype=jnp.float32)
    act3 = jax.random.normal(k_act3, (batch3, act_dim), dtype=jnp.float32)

    q3 = mlpq_forward(obs3, act3, params)
    jax.block_until_ready(q3)
    q3_ref = mlpq_reference(obs3, act3, params)
    assert q3.shape == (batch3,), q3.shape
    assert jnp.allclose(q3, q3_ref, atol=1e-5, rtol=1e-5)

    print("KERNEL_OK")
</pallas_src>

<mosaic_0001>
module attributes {stable_mosaic.version = 11 : i64} {
  func.func @mlpq_kernel(%arg0: i32, %arg1: memref<11x128xf32, #tpu.memory_space<vmem>>, %arg2: memref<3x128xf32, #tpu.memory_space<vmem>>, %arg3: memref<32x11xf32, #tpu.memory_space<vmem>>, %arg4: memref<32x3xf32, #tpu.memory_space<vmem>>, %arg5: memref<32x1xf32, #tpu.memory_space<vmem>>, %arg6: memref<32x32xf32, #tpu.memory_space<vmem>>, %arg7: memref<32x1xf32, #tpu.memory_space<vmem>>, %arg8: memref<1x32xf32, #tpu.memory_space<vmem>>, %arg9: memref<1x1xf32, #tpu.memory_space<vmem>>, %arg10: memref<1x128xf32, #tpu.memory_space<vmem>>) attributes {dimension_semantics = [#tpu.dimension_semantics<parallel>], iteration_bounds = array<i64: 1>, scalar_prefetch = 0 : i64, scratch_operands = 0 : i64, tpu.core_type = #tpu.core_type<tc>, window_params = [{transform_indices = @transform_0, window_bounds = array<i64: 11, 128>}, {transform_indices = @transform_1, window_bounds = array<i64: 3, 128>}, {pipeline_mode = #tpu.pipeline_mode<synchronous>, transform_indices = @transform_2, window_bounds = array<i64: 32, 11>}, {pipeline_mode = #tpu.pipeline_mode<synchronous>, transform_indices = @transform_3, window_bounds = array<i64: 32, 3>}, {pipeline_mode = #tpu.pipeline_mode<synchronous>, transform_indices = @transform_4, window_bounds = array<i64: 32, 1>}, {pipeline_mode = #tpu.pipeline_mode<synchronous>, transform_indices = @transform_5, window_bounds = array<i64: 32, 32>}, {pipeline_mode = #tpu.pipeline_mode<synchronous>, transform_indices = @transform_6, window_bounds = array<i64: 32, 1>}, {pipeline_mode = #tpu.pipeline_mode<synchronous>, transform_indices = @transform_7, window_bounds = array<i64: 1, 32>}, {pipeline_mode = #tpu.pipeline_mode<synchronous>, transform_indices = @transform_8, window_bounds = array<i64: 1, 1>}, {transform_indices = @transform_9, window_bounds = array<i64: 1, 128>}]} {
    %c0 = arith.constant 0 : index
    %c0_0 = arith.constant 0 : index
    %0 = vector.load %arg3[%c0, %c0_0] : memref<32x11xf32, #tpu.memory_space<vmem>>, vector<32x11xf32>
    %c0_1 = arith.constant 0 : index
    %c0_2 = arith.constant 0 : index
    %1 = vector.load %arg1[%c0_1, %c0_2] : memref<11x128xf32, #tpu.memory_space<vmem>>, vector<11x128xf32>
    %cst = arith.constant dense<0.000000e+00> : vector<32x128xf32>
    %2 = tpu.matmul %0, %1, %cst {dimension_numbers = #tpu.dot_dimension_numbers<[1], [0], [0], [1], [0, 0, 1, 1], [], []>} : vector<32x11xf32>, vector<11x128xf32>, vector<32x128xf32> -> vector<32x128xf32>
    %c0_3 = arith.constant 0 : index
    %c0_4 = arith.constant 0 : index
    %3 = vector.load %arg4[%c0_3, %c0_4] : memref<32x3xf32, #tpu.memory_space<vmem>>, vector<32x3xf32>
    %c0_5 = arith.constant 0 : index
    %c0_6 = arith.constant 0 : index
    %4 = vector.load %arg2[%c0_5, %c0_6] : memref<3x128xf32, #tpu.memory_space<vmem>>, vector<3x128xf32>
    %cst_7 = arith.constant dense<0.000000e+00> : vector<32x128xf32>
    %5 = tpu.matmul %3, %4, %cst_7 {dimension_numbers = #tpu.dot_dimension_numbers<[1], [0], [0], [1], [0, 0, 1, 1], [], []>} : vector<32x3xf32>, vector<3x128xf32>, vector<32x128xf32> -> vector<32x128xf32>
    %6 = arith.addf %2, %5 : vector<32x128xf32>
    %c0_8 = arith.constant 0 : index
    %c0_9 = arith.constant 0 : index
    %7 = vector.load %arg5[%c0_8, %c0_9] : memref<32x1xf32, #tpu.memory_space<vmem>>, vector<32x1xf32>
    %8 = vector.broadcast %7 : vector<32x1xf32> to vector<32x128xf32>
    %9 = arith.addf %6, %8 : vector<32x128xf32>
    %10 = math.tanh %9 : vector<32x128xf32>
    %c0_10 = arith.constant 0 : index
    %c0_11 = arith.constant 0 : index
    %11 = vector.load %arg6[%c0_10, %c0_11] : memref<32x32xf32, #tpu.memory_space<vmem>>, vector<32x32xf32>
    %cst_12 = arith.constant dense<0.000000e+00> : vector<32x128xf32>
    %12 = tpu.matmul %11, %10, %cst_12 {dimension_numbers = #tpu.dot_dimension_numbers<[1], [0], [0], [1], [0, 0, 1, 1], [], []>} : vector<32x32xf32>, vector<32x128xf32>, vector<32x128xf32> -> vector<32x128xf32>
    %c0_13 = arith.constant 0 : index
    %c0_14 = arith.constant 0 : index
    %13 = vector.load %arg7[%c0_13, %c0_14] : memref<32x1xf32, #tpu.memory_space<vmem>>, vector<32x1xf32>
    %14 = vector.broadcast %13 : vector<32x1xf32> to vector<32x128xf32>
    %15 = arith.addf %12, %14 : vector<32x128xf32>
    %16 = math.tanh %15 : vector<32x128xf32>
    %c0_15 = arith.constant 0 : index
    %c0_16 = arith.constant 0 : index
    %17 = vector.load %arg8[%c0_15, %c0_16] : memref<1x32xf32, #tpu.memory_space<vmem>>, vector<1x32xf32>
    %cst_17 = arith.constant dense<0.000000e+00> : vector<1x128xf32>
    %18 = tpu.matmul %17, %16, %cst_17 {dimension_numbers = #tpu.dot_dimension_numbers<[1], [0], [0], [1], [0, 0, 1, 1], [], []>} : vector<1x32xf32>, vector<32x128xf32>, vector<1x128xf32> -> vector<1x128xf32>
    %c0_18 = arith.constant 0 : index
    %c0_19 = arith.constant 0 : index
    %19 = vector.load %arg9[%c0_18, %c0_19] : memref<1x1xf32, #tpu.memory_space<vmem>>, vector<1x1xf32>
    %20 = vector.broadcast %19 : vector<1x1xf32> to vector<1x128xf32>
    %21 = arith.addf %18, %20 : vector<1x128xf32>
    %c0_20 = arith.constant 0 : index
    %c0_21 = arith.constant 0 : index
    %22 = vector.load %arg10[%c0_20, %c0_21] : memref<1x128xf32, #tpu.memory_space<vmem>>, vector<1x128xf32>
    tpu.vector_store %arg10[%c0_20, %c0_21], %21 {strides = array<i32>} : memref<1x128xf32, #tpu.memory_space<vmem>>, vector<1x128xf32>,
    return
  }
  func.func @transform_0(%arg0: i32) -> (i32, i32) {
    %c0_i32 = arith.constant 0 : i32
    %c0_i32_0 = arith.constant 0 : i32
    return %c0_i32, %arg0 : i32, i32
  }
  func.func @transform_1(%arg0: i32) -> (i32, i32) {
    %c0_i32 = arith.constant 0 : i32
    %c0_i32_0 = arith.constant 0 : i32
    return %c0_i32, %arg0 : i32, i32
  }
  func.func @transform_2(%arg0: i32) -> (i32, i32) {
    %c0_i32 = arith.constant 0 : i32
    %c0_i32_0 = arith.constant 0 : i32
    %c0_i32_1 = arith.constant 0 : i32
    return %c0_i32, %c0_i32_0 : i32, i32
  }
  func.func @transform_3(%arg0: i32) -> (i32, i32) {
    %c0_i32 = arith.constant 0 : i32
    %c0_i32_0 = arith.constant 0 : i32
    %c0_i32_1 = arith.constant 0 : i32
    return %c0_i32, %c0_i32_0 : i32, i32
  }
  func.func @transform_4(%arg0: i32) -> (i32, i32) {
    %c0_i32 = arith.constant 0 : i32
    %c0_i32_0 = arith.constant 0 : i32
    %c0_i32_1 = arith.constant 0 : i32
    return %c0_i32, %c0_i32_0 : i32, i32
  }
  func.func @transform_5(%arg0: i32) -> (i32, i32) {
    %c0_i32 = arith.constant 0 : i32
    %c0_i32_0 = arith.constant 0 : i32
    %c0_i32_1 = arith.constant 0 : i32
    return %c0_i32, %c0_i32_0 : i32, i32
  }
  func.func @transform_6(%arg0: i32) -> (i32, i32) {
    %c0_i32 = arith.constant 0 : i32
    %c0_i32_0 = arith.constant 0 : i32
    %c0_i32_1 = arith.constant 0 : i32
    return %c0_i32, %c0_i32_0 : i32, i32
  }
  func.func @transform_7(%arg0: i32) -> (i32, i32) {
    %c0_i32 = arith.constant 0 : i32
    %c0_i32_0 = arith.constant 0 : i32
    %c0_i32_1 = arith.constant 0 : i32
    return %c0_i32, %c0_i32_0 : i32, i32
  }
  func.func @transform_8(%arg0: i32) -> (i32, i32) {
    %c0_i32 = arith.constant 0 : i32
    %c0_i32_0 = arith.constant 0 : i32
    %c0_i32_1 = arith.constant 0 : i32
    return %c0_i32, %c0_i32_0 : i32, i32
  }
  func.func @transform_9(%arg0: i32) -> (i32, i32) {
    %c0_i32 = arith.constant 0 : i32
    %c0_i32_0 = arith.constant 0 : i32
    return %c0_i32, %arg0 : i32, i32
  }
}

</mosaic_0001>

<llo_original>
// kernel: tpu_custom_call.1
$region0: #{tpu_custom_call.1}
  #allocation0 [shape = 'u32[]', space=smem, size = 0x4, offset = 0x4, fixed_abs, tag = 'smem constant byte address 0x4 - core index']
  #allocation1 [shape = 'u32[144,128]{1,0:T(1,128)}', space=vmem, size = 0x12000, scoped, tag = 'internal scratch']
  #allocation2 [shape = 'f32[1,1]{1,0:T(1,128)S(1)}', space=vmem, size = 0x200, scoped, tag = 'scoped memory for tpu_custom_call.1']
  %s0 = inlined_call_operand.vmem [shape: f32[11,128], index: 0, kind: input, shape index: {}]
  %s1 = inlined_call_operand.vmem [shape: f32[3,128], index: 1, kind: input, shape index: {}]
  %s2 = inlined_call_operand.vmem [shape: f32[32,11], index: 2, kind: input, shape index: {}]
  %s3 = inlined_call_operand.vmem [shape: f32[32,3], index: 3, kind: input, shape index: {}]
  %s4 = inlined_call_operand.vmem [shape: f32[32,1], index: 4, kind: input, shape index: {}]
  %s5 = inlined_call_operand.vmem [shape: f32[32,32], index: 5, kind: input, shape index: {}]
  %s6 = inlined_call_operand.vmem [shape: f32[32,1], index: 6, kind: input, shape index: {}]
  %s7 = inlined_call_operand.vmem [shape: f32[1,32], index: 7, kind: input, shape index: {}]
  %s8 = inlined_call_operand.<no memory space> [shape: f32[1,1], index: 8, kind: input, shape index: {}]
  %s9 = inlined_call_operand.hbm [shape: f32[1,128], index: 9, kind: output, shape index: {}]
  %s10 = sld [smem:[#allocation0]]
  $region46: #{tpu_custom_call.1} parent=0
    _
  %s12 = ssub.s32 1, %s10
  %s13 = scalar_select 0, %s12, %s10
  %v14 = vstv %s8
  %15 = vst [vmem:[#allocation2] sm:$0x1] %v14
  $region1: #{tpu_custom_call.1} parent=0
    #allocation3 [shape = 'u8[512]{0}', space=vmem, size = 0x400, scoped, tag = 'output window, operand 0, single buffered']
    #allocation4 [shape = 's32[1]{0}', space=sflag, size = 0x4, scoped, tag = 'scoped memory for tpu_custom_call.1']
    %16 = vsyncpa [#allocation4], 0
    // Predicated region
    $region2: #{tpu_custom_call.1} parent=1 // pred_check
      _
    $region3: #{tpu_custom_call.1} parent=1 // pred_check_branch
      %18 = sbr.rel (0) target = $region5
    $region4: #{tpu_custom_call.1} parent=1 // pred_region
      _
    $region5: #{tpu_custom_call.1} parent=1 // pred_fallthru
      _
    // Predicated region
    $region6: #{tpu_custom_call.1} parent=1 // pred_check
      _
    $region7: #{tpu_custom_call.1} parent=1 // pred_check_branch
      %20 = sbr.rel (0) target = $region9
    $region8: #{tpu_custom_call.1} parent=1 // pred_region
      _
    $region9: #{tpu_custom_call.1} parent=1 // pred_fallthru
      _
    // Predicated region
    $region10: #{tpu_custom_call.1} parent=1 // pred_check
      _
    $region11: #{tpu_custom_call.1} parent=1 // pred_check_branch
      %22 = sbr.rel (0) target = $region13
    $region12: #{tpu_custom_call.1} parent=1 // pred_region
      _
    $region13: #{tpu_custom_call.1} parent=1 // pred_fallthru
      _
    // Predicated region
    $region14: #{tpu_custom_call.1} parent=1 // pred_check
      _
    $region15: #{tpu_custom_call.1} parent=1 // pred_check_branch
      %24 = sbr.rel (0) target = $region17
    $region16: #{tpu_custom_call.1} parent=1 // pred_region
      _
    $region17: #{tpu_custom_call.1} parent=1 // pred_fallthru
      _
    // Predicated region
    $region18: #{tpu_custom_call.1} parent=1 // pred_check
      _
    $region19: #{tpu_custom_call.1} parent=1 // pred_check_branch
      %26 = sbr.rel (0) target = $region21
    $region20: #{tpu_custom_call.1} parent=1 // pred_region
      _
    $region21: #{tpu_custom_call.1} parent=1 // pred_fallthru
      _
    // Predicated region
    $region22: #{tpu_custom_call.1} parent=1 // pred_check
      _
    $region23: #{tpu_custom_call.1} parent=1 // pred_check_branch
      %28 = sbr.rel (0) target = $region25
    $region24: #{tpu_custom_call.1} parent=1 // pred_region
      _
    $region25: #{tpu_custom_call.1} parent=1 // pred_fallthru
      _
    // Predicated region
    $region26: #{tpu_custom_call.1} parent=1 // pred_check
      _
    $region27: #{tpu_custom_call.1} parent=1 // pred_check_branch
      %30 = sbr.rel (0) target = $region29
    $region28: #{tpu_custom_call.1} parent=1 // pred_region
      _
    $region29: #{tpu_custom_call.1} parent=1 // pred_fallthru
      _
    // Predicated region
    $region30: #{tpu_custom_call.1} parent=1 // pred_check
      _
    $region31: #{tpu_custom_call.1} parent=1 // pred_check_branch
      %32 = sbr.rel (0) target = $region33
    $region32: #{tpu_custom_call.1} parent=1 // pred_region
      _
    $region33: #{tpu_custom_call.1} parent=1 // pred_fallthru
      _
    // Predicated region
    $region34: #{tpu_custom_call.1} parent=1 // pred_check
      _
    $region35: #{tpu_custom_call.1} parent=1 // pred_check_branch
      %34 = sbr.rel (0) target = $region37
    $region36: #{tpu_custom_call.1} parent=1 // pred_region
      _
    $region37: #{tpu_custom_call.1} parent=1 // pred_fallthru
      _
    %v35 = vld [vmem:[%s2] sm:$0xff]
    %v36 = vld [vmem:[%s2 + $0x8] sm:$0xff]
    %v37 = vld [vmem:[%s2 + $0x10] sm:$0xff]
    %v38 = vld [vmem:[%s2 + $0x18] sm:$0xff]
    %v39 = vld [vmem:[%s0] sm:$0xff]
    %v40 = vld [vmem:[%s0 + $0x8] sm:$0x7]
    %v41 = vld [vmem:[%s3] sm:$0xff]
    %v42 = vld [vmem:[%s3 + $0x8] sm:$0xff]
    %v43 = vld [vmem:[%s3 + $0x10] sm:$0xff]
    %v44 = vld [vmem:[%s3 + $0x18] sm:$0xff]
    %v45 = vld [vmem:[%s1] sm:$0x7]
    %vm46 = vcmask 23552
    %v48 = vsel %vm46, %v41, 0
    %v51 = vsel %vm46, %v42, 0
    %v54 = vsel %vm46, %v43, 0
    %v57 = vsel %vm46, %v44, 0
    %vm59 = vcmask 1042432
    %v61 = vsel %vm59, %v45, 0
    %63 = vmatprep.subr.mxu0 0.0
    %64 = vmatpush1.msra.mxu0 0.0
    %65 = vmatprep.subr.mxu0 0.0
    %66 = vmatpush1.msra.mxu0 0.0
    %67 = vmatprep.subr.mxu0 0.0
    %68 = vmatpush1.msra.mxu0 0.0
    %69 = vmatprep.subr.mxu0 0.0
    %70 = vmatpush1.msra.mxu0 0.0
    %71 = vmatprep.subr.mxu0 0.0
    %72 = vmatpush1.msra.mxu0 0.0
    %73 = vmatprep.subr.mxu0 0.0
    %74 = vmatpush1.msra.mxu0 0.0
    %75 = vmatprep.subr.mxu0 0.0
    %76 = vmatpush1.msra.mxu0 0.0
    %77 = vmatprep.subr.mxu0 0.0
    %78 = vmatpush1.msra.mxu0 0.0
    %79 = vmatprep.subr.mxu0 0.0
    %80 = vmatpush1.msra.mxu0 0.0
    %81 = vmatprep.subr.mxu0 0.0
    %82 = vmatpush1.msra.mxu0 0.0
    %83 = vmatprep.subr.mxu0 0.0
    %84 = vmatpush1.msra.mxu0 0.0
    %85 = vmatprep.subr.mxu0 0.0
    %86 = vmatpush1.msra.mxu0 0.0
    %87 = vmatprep.subr.mxu0 0.0
    %88 = vmatpush1.msra.mxu0 0.0
    %89 = vmatprep.subr.mxu0 0.0
    %90 = vmatpush1.msra.mxu0 0.0
    %91 = vmatprep.subr.mxu0 0.0
    %92 = vmatpush1.msra.mxu0 0.0
    %93 = vmatprep.subr.mxu0 0.0
    %94 = vmatpush1.msra.mxu0 %v61
    %95 = vmatprep.subr.mxu0 0.0
    %96 = vmatpush2.msra.mxu0 0.0
    %97 = vmatprep.subr.mxu0 0.0
    %98 = vmatpush2.msra.mxu0 0.0
    %99 = vmatprep.subr.mxu0 0.0
    %100 = vmatpush2.msra.mxu0 0.0
    %101 = vmatprep.subr.mxu0 0.0
    %102 = vmatpush2.msra.mxu0 0.0
    %103 = vmatprep.subr.mxu0 0.0
    %104 = vmatpush2.msra.mxu0 0.0
    %105 = vmatprep.subr.mxu0 0.0
    %106 = vmatpush2.msra.mxu0 0.0
    %107 = vmatprep.subr.mxu0 0.0
    %108 = vmatpush2.msra.mxu0 0.0
    %109 = vmatprep.subr.mxu0 0.0
    %110 = vmatpush2.msra.mxu0 0.0
    %111 = vmatprep.subr.mxu0 0.0
    %112 = vmatpush2.msra.mxu0 0.0
    %113 = vmatprep.subr.mxu0 0.0
    %114 = vmatpush2.msra.mxu0 0.0
    %115 = vmatprep.subr.mxu0 0.0
    %116 = vmatpush2.msra.mxu0 0.0
    %117 = vmatprep.subr.mxu0 0.0
    %118 = vmatpush2.msra.mxu0 0.0
    %119 = vmatprep.subr.mxu0 0.0
    %120 = vmatpush2.msra.mxu0 0.0
    %121 = vmatprep.subr.mxu0 0.0
    %122 = vmatpush2.msra.mxu0 0.0
    %123 = vmatprep.subr.mxu0 0.0
    %124 = vmatpush2.msra.mxu0 0.0
    %125 = vmatprep.subr.mxu0 0.0
    %126 = vmatpush2.msra.mxu0 0.0
    %127 = vmatprep.mubr.f32.mxu0 0.0
    %128 = vmatmul.mubr.f32.gmra.mxu0 %v48
    %v129 = vpop.f32.mrf.mxu0
    %v130 = vadd.f32 0.0, %v129
    %v131 = vpop.f32.mrf.mxu0
    %132 = vmatprep.mubr.f32.mxu0 0.0
    %133 = vmatmul.mubr.f32.gmra.mxu0 %v51
    %v134 = vpop.f32.mrf.mxu0
    %v135 = vadd.f32 0.0, %v134
    %v136 = vpop.f32.mrf.mxu0
    %137 = vmatprep.mubr.f32.mxu0 0.0
    %138 = vmatmul.mubr.f32.gmra.mxu0 %v54
    %v139 = vpop.f32.mrf.mxu0
    %v140 = vadd.f32 0.0, %v139
    %v141 = vpop.f32.mrf.mxu0
    %142 = vmatprep.mubr.f32.mxu0 0.0
    %143 = vmatmul.mubr.f32.gmra.mxu0 %v57
    %v144 = vpop.f32.mrf.mxu0
    %v145 = vadd.f32 0.0, %v144
    %v146 = vpop.f32.mrf.mxu0
    %147 = vdwg.mxu0
    %vm148 = vcmask 89088
    %v150 = vsel %vm148, %v35, 0
    %v153 = vsel %vm148, %v36, 0
    %v156 = vsel %vm148, %v37, 0
    %v159 = vsel %vm148, %v38, 0
    %v162 = vsel %vm59, %v40, 0
    %164 = vmatprep.subr.mxu0 0.0
    %165 = vmatpush1.msra.mxu0 0.0
    %166 = vmatprep.subr.mxu0 0.0
    %167 = vmatpush1.msra.mxu0 0.0
    %168 = vmatprep.subr.mxu0 0.0
    %169 = vmatpush1.msra.mxu0 0.0
    %170 = vmatprep.subr.mxu0 0.0
    %171 = vmatpush1.msra.mxu0 0.0
    %172 = vmatprep.subr.mxu0 0.0
    %173 = vmatpush1.msra.mxu0 0.0
    %174 = vmatprep.subr.mxu0 0.0
    %175 = vmatpush1.msra.mxu0 0.0
    %176 = vmatprep.subr.mxu0 0.0
    %177 = vmatpush1.msra.mxu0 0.0
    %178 = vmatprep.subr.mxu0 0.0
    %179 = vmatpush1.msra.mxu0 0.0
    %180 = vmatprep.subr.mxu0 0.0
    %181 = vmatpush1.msra.mxu0 0.0
    %182 = vmatprep.subr.mxu0 0.0
    %183 = vmatpush1.msra.mxu0 0.0
    %184 = vmatprep.subr.mxu0 0.0
    %185 = vmatpush1.msra.mxu0 0.0
    %186 = vmatprep.subr.mxu0 0.0
    %187 = vmatpush1.msra.mxu0 0.0
    %188 = vmatprep.subr.mxu0 0.0
    %189 = vmatpush1.msra.mxu0 0.0
    %190 = vmatprep.subr.mxu0 0.0
    %191 = vmatpush1.msra.mxu0 0.0
    %192 = vmatprep.subr.mxu0 0.0
    %193 = vmatpush1.msra.mxu0 %v162
    %194 = vmatprep.subr.mxu0 0.0
    %195 = vmatpush1.msra.mxu0 %v39
    %196 = vmatprep.subr.mxu0 0.0
    %197 = vmatpush2.msra.mxu0 0.0
    %198 = vmatprep.subr.mxu0 0.0
    %199 = vmatpush2.msra.mxu0 0.0
    %200 = vmatprep.subr.mxu0 0.0
    %201 = vmatpush2.msra.mxu0 0.0
    %202 = vmatprep.subr.mxu0 0.0
    %203 = vmatpush2.msra.mxu0 0.0
    %204 = vmatprep.subr.mxu0 0.0
    %205 = vmatpush2.msra.mxu0 0.0
    %206 = vmatprep.subr.mxu0 0.0
    %207 = vmatpush2.msra.mxu0 0.0
    %208 = vmatprep.subr.mxu0 0.0
    %209 = vmatpush2.msra.mxu0 0.0
    %210 = vmatprep.subr.mxu0 0.0
    %211 = vmatpush2.msra.mxu0 0.0
    %212 = vmatprep.subr.mxu0 0.0
    %213 = vmatpush2.msra.mxu0 0.0
    %214 = vmatprep.subr.mxu0 0.0
    %215 = vmatpush2.msra.mxu0 0.0
    %216 = vmatprep.subr.mxu0 0.0
    %217 = vmatpush2.msra.mxu0 0.0
    %218 = vmatprep.subr.mxu0 0.0
    %219 = vmatpush2.msra.mxu0 0.0
    %220 = vmatprep.subr.mxu0 0.0
    %221 = vmatpush2.msra.mxu0 0.0
    %222 = vmatprep.subr.mxu0 0.0
    %223 = vmatpush2.msra.mxu0 0.0
    %224 = vmatprep.subr.mxu0 0.0
    %225 = vmatpush2.msra.mxu0 0.0
    %226 = vmatprep.subr.mxu0 0.0
    %227 = vmatpush2.msra.mxu0 0.0
    %228 = vmatprep.mubr.f32.mxu0 0.0
    %229 = vmatmul.mubr.f32.gmra.mxu0 %v150
    %v230 = vpop.f32.mrf.mxu0
    %v231 = vadd.f32 %v130, %v230
    %v232 = vpop.f32.mrf.mxu0
    %233 = vmatprep.mubr.f32.mxu0 0.0
    %234 = vmatmul.mubr.f32.gmra.mxu0 %v153
    %v235 = vpop.f32.mrf.mxu0
    %v236 = vadd.f32 %v135, %v235
    %v237 = vpop.f32.mrf.mxu0
    %238 = vmatprep.mubr.f32.mxu0 0.0
    %239 = vmatmul.mubr.f32.gmra.mxu0 %v156
    %v240 = vpop.f32.mrf.mxu0
    %v241 = vadd.f32 %v140, %v240
    %v242 = vpop.f32.mrf.mxu0
    %243 = vmatprep.mubr.f32.mxu0 0.0
    %244 = vmatmul.mubr.f32.gmra.mxu0 %v159
    %v245 = vpop.f32.mrf.mxu0
    %v246 = vadd.f32 %v145, %v245
    %v247 = vpop.f32.mrf.mxu0
    %248 = vdwg.mxu0
    %v249 = vld [vmem:[%s4] sm:$0xff]
    %v250 = vld [vmem:[%s4 + $0x8] sm:$0xff]
    %v251 = vld [vmem:[%s4 + $0x10] sm:$0xff]
    %v252 = vld [vmem:[%s4 + $0x18] sm:$0xff]
    %254 = vset.pattern.permute.xlu0 0
    %255 = vperm.xlu0 %254, %v249
    %v256 = vpop.permute.xlu0 %255
    %259 = vset.pattern.permute.xlu0 0
    %260 = vperm.xlu0 %259, %v250
    %v261 = vpop.permute.xlu0 %260
    %264 = vset.pattern.permute.xlu0 0
    %265 = vperm.xlu0 %264, %v251
    %v266 = vpop.permute.xlu0 %265
    %269 = vset.pattern.permute.xlu0 0
    %270 = vperm.xlu0 %269, %v252
    %v271 = vpop.permute.xlu0 %270
    %v273 = vadd.f32 %v231, %v256
    %v274 = vadd.f32 %v236, %v261
    %v275 = vadd.f32 %v241, %v266
    %v276 = vadd.f32 %v246, %v271
    %v277 = vtanh.pop %v273
    %v278 = vtanh.pop %v274
    %v279 = vtanh.pop %v275
    %v280 = vtanh.pop %v276
    %v281 = vld [vmem:[%s5] sm:$0xff]
    %v282 = vld [vmem:[%s5 + $0x8] sm:$0xff]
    %v283 = vld [vmem:[%s5 + $0x10] sm:$0xff]
    %v284 = vld [vmem:[%s5 + $0x18] sm:$0xff]
    %v285 = vld [vmem:[%s6] sm:$0xff]
    %v286 = vld [vmem:[%s6 + $0x8] sm:$0xff]
    %v287 = vld [vmem:[%s6 + $0x10] sm:$0xff]
    %v288 = vld [vmem:[%s6 + $0x18] sm:$0xff]
    %290 = vset.pattern.permute.xlu0 0
    %291 = vperm.xlu0 %290, %v285
    %v292 = vpop.permute.xlu0 %291
    %295 = vset.pattern.permute.xlu0 0
    %296 = vperm.xlu0 %295, %v286
    %v297 = vpop.permute.xlu0 %296
    %300 = vset.pattern.permute.xlu0 0
    %301 = vperm.xlu0 %300, %v287
    %v302 = vpop.permute.xlu0 %301
    %305 = vset.pattern.permute.xlu0 0
    %306 = vperm.xlu0 %305, %v288
    %v307 = vpop.permute.xlu0 %306
    %vm309 = vcmask 261120
    %v311 = vsel %vm309, %v281, 0
    %v314 = vsel %vm309, %v282, 0
    %v317 = vsel %vm309, %v283, 0
    %v320 = vsel %vm309, %v284, 0
    %322 = vmatprep.subr.mxu0 0.0
    %323 = vmatpush1.msra.mxu0 0.0
    %324 = vmatprep.subr.mxu0 0.0
    %325 = vmatpush1.msra.mxu0 0.0
    %326 = vmatprep.subr.mxu0 0.0
    %327 = vmatpush1.msra.mxu0 0.0
    %328 = vmatprep.subr.mxu0 0.0
    %329 = vmatpush1.msra.mxu0 0.0
    %330 = vmatprep.subr.mxu0 0.0
    %331 = vmatpush1.msra.mxu0 0.0
    %332 = vmatprep.subr.mxu0 0.0
    %333 = vmatpush1.msra.mxu0 0.0
    %334 = vmatprep.subr.mxu0 0.0
    %335 = vmatpush1.msra.mxu0 0.0
    %336 = vmatprep.subr.mxu0 0.0
    %337 = vmatpush1.msra.mxu0 0.0
    %338 = vmatprep.subr.mxu0 0.0
    %339 = vmatpush1.msra.mxu0 0.0
    %340 = vmatprep.subr.mxu0 0.0
    %341 = vmatpush1.msra.mxu0 0.0
    %342 = vmatprep.subr.mxu0 0.0
    %343 = vmatpush1.msra.mxu0 0.0
    %344 = vmatprep.subr.mxu0 0.0
    %345 = vmatpush1.msra.mxu0 0.0
    %346 = vmatprep.subr.mxu0 0.0
    %347 = vmatpush1.msra.mxu0 %v280
    %348 = vmatprep.subr.mxu0 0.0
    %349 = vmatpush1.msra.mxu0 %v279
    %350 = vmatprep.subr.mxu0 0.0
    %351 = vmatpush1.msra.mxu0 %v278
    %352 = vmatprep.subr.mxu0 0.0
    %353 = vmatpush1.msra.mxu0 %v277
    %354 = vmatprep.subr.mxu0 0.0
    %355 = vmatpush2.msra.mxu0 0.0
    %356 = vmatprep.subr.mxu0 0.0
    %357 = vmatpush2.msra.mxu0 0.0
    %358 = vmatprep.subr.mxu0 0.0
    %359 = vmatpush2.msra.mxu0 0.0
    %360 = vmatprep.subr.mxu0 0.0
    %361 = vmatpush2.msra.mxu0 0.0
    %362 = vmatprep.subr.mxu0 0.0
    %363 = vmatpush2.msra.mxu0 0.0
    %364 = vmatprep.subr.mxu0 0.0
    %365 = vmatpush2.msra.mxu0 0.0
    %366 = vmatprep.subr.mxu0 0.0
    %367 = vmatpush2.msra.mxu0 0.0
    %368 = vmatprep.subr.mxu0 0.0
    %369 = vmatpush2.msra.mxu0 0.0
    %370 = vmatprep.subr.mxu0 0.0
    %371 = vmatpush2.msra.mxu0 0.0
    %372 = vmatprep.subr.mxu0 0.0
    %373 = vmatpush2.msra.mxu0 0.0
    %374 = vmatprep.subr.mxu0 0.0
    %375 = vmatpush2.msra.mxu0 0.0
    %376 = vmatprep.subr.mxu0 0.0
    %377 = vmatpush2.msra.mxu0 0.0
    %378 = vmatprep.subr.mxu0 0.0
    %379 = vmatpush2.msra.mxu0 0.0
    %380 = vmatprep.subr.mxu0 0.0
    %381 = vmatpush2.msra.mxu0 0.0
    %382 = vmatprep.subr.mxu0 0.0
    %383 = vmatpush2.msra.mxu0 0.0
    %384 = vmatprep.subr.mxu0 0.0
    %385 = vmatpush2.msra.mxu0 0.0
    %386 = vmatprep.mubr.f32.mxu0 0.0
    %387 = vmatmul.mubr.f32.gmra.mxu0 %v311
    %v388 = vpop.f32.mrf.mxu0
    %v389 = vadd.f32 %v292, %v388
    %v390 = vpop.f32.mrf.mxu0
    %391 = vmatprep.mubr.f32.mxu0 0.0
    %392 = vmatmul.mubr.f32.gmra.mxu0 %v314
    %v393 = vpop.f32.mrf.mxu0
    %v394 = vadd.f32 %v297, %v393
    %v395 = vpop.f32.mrf.mxu0
    %396 = vmatprep.mubr.f32.mxu0 0.0
    %397 = vmatmul.mubr.f32.gmra.mxu0 %v317
    %v398 = vpop.f32.mrf.mxu0
    %v399 = vadd.f32 %v302, %v398
    %v400 = vpop.f32.mrf.mxu0
    %401 = vmatprep.mubr.f32.mxu0 0.0
    %402 = vmatmul.mubr.f32.gmra.mxu0 %v320
    %v403 = vpop.f32.mrf.mxu0
    %v404 = vadd.f32 %v307, %v403
    %v405 = vpop.f32.mrf.mxu0
    %406 = vdwg.mxu0
    %v407 = vtanh.pop %v389
    %v408 = vtanh.pop %v394
    %v409 = vtanh.pop %v399
    %v410 = vtanh.pop %v404
    %v411 = vld [vmem:[%s7] sm:$0x1]
    %v412 = vld [vmem:[#allocation2] sm:$0x1]
    %414 = vset.pattern.permute.xlu0 0
    %415 = vperm.xlu0 %414, %v412
    %v416 = vpop.permute.xlu0 %415
    %v418 = vlaneseq
    %v419 = vshrl.u32 %v418, 7
    %v420 = vsub.s32 0, %v419
    %v421 = vrot.slane %v416, %v420
    %v423 = vsel %vm309, %v411, 0
    %425 = vmatprep.subr.mxu0 0.0
    %426 = vmatpush1.msra.mxu0 0.0
    %427 = vmatprep.subr.mxu0 0.0
    %428 = vmatpush1.msra.mxu0 0.0
    %429 = vmatprep.subr.mxu0 0.0
    %430 = vmatpush1.msra.mxu0 0.0
    %431 = vmatprep.subr.mxu0 0.0
    %432 = vmatpush1.msra.mxu0 0.0
    %433 = vmatprep.subr.mxu0 0.0
    %434 = vmatpush1.msra.mxu0 0.0
    %435 = vmatprep.subr.mxu0 0.0
    %436 = vmatpush1.msra.mxu0 0.0
    %437 = vmatprep.subr.mxu0 0.0
    %438 = vmatpush1.msra.mxu0 0.0
    %439 = vmatprep.subr.mxu0 0.0
    %440 = vmatpush1.msra.mxu0 0.0
    %441 = vmatprep.subr.mxu0 0.0
    %442 = vmatpush1.msra.mxu0 0.0
    %443 = vmatprep.subr.mxu0 0.0
    %444 = vmatpush1.msra.mxu0 0.0
    %445 = vmatprep.subr.mxu0 0.0
    %446 = vmatpush1.msra.mxu0 0.0
    %447 = vmatprep.subr.mxu0 0.0
    %448 = vmatpush1.msra.mxu0 0.0
    %449 = vmatprep.subr.mxu0 0.0
    %450 = vmatpush1.msra.mxu0 %v410
    %451 = vmatprep.subr.mxu0 0.0
    %452 = vmatpush1.msra.mxu0 %v409
    %453 = vmatprep.subr.mxu0 0.0
    %454 = vmatpush1.msra.mxu0 %v408
    %455 = vmatprep.subr.mxu0 0.0
    %456 = vmatpush1.msra.mxu0 %v407
    %457 = vmatprep.subr.mxu0 0.0
    %458 = vmatpush2.msra.mxu0 0.0
    %459 = vmatprep.subr.mxu0 0.0
    %460 = vmatpush2.msra.mxu0 0.0
    %461 = vmatprep.subr.mxu0 0.0
    %462 = vmatpush2.msra.mxu0 0.0
    %463 = vmatprep.subr.mxu0 0.0
    %464 = vmatpush2.msra.mxu0 0.0
    %465 = vmatprep.subr.mxu0 0.0
    %466 = vmatpush2.msra.mxu0 0.0
    %467 = vmatprep.subr.mxu0 0.0
    %468 = vmatpush2.msra.mxu0 0.0
    %469 = vmatprep.subr.mxu0 0.0
    %470 = vmatpush2.msra.mxu0 0.0
    %471 = vmatprep.subr.mxu0 0.0
    %472 = vmatpush2.msra.mxu0 0.0
    %473 = vmatprep.subr.mxu0 0.0
    %474 = vmatpush2.msra.mxu0 0.0
    %475 = vmatprep.subr.mxu0 0.0
    %476 = vmatpush2.msra.mxu0 0.0
    %477 = vmatprep.subr.mxu0 0.0
    %478 = vmatpush2.msra.mxu0 0.0
    %479 = vmatprep.subr.mxu0 0.0
    %480 = vmatpush2.msra.mxu0 0.0
    %481 = vmatprep.subr.mxu0 0.0
    %482 = vmatpush2.msra.mxu0 0.0
    %483 = vmatprep.subr.mxu0 0.0
    %484 = vmatpush2.msra.mxu0 0.0
    %485 = vmatprep.subr.mxu0 0.0
    %486 = vmatpush2.msra.mxu0 0.0
    %487 = vmatprep.subr.mxu0 0.0
    %488 = vmatpush2.msra.mxu0 0.0
    %489 = vmatprep.mubr.f32.mxu0 0.0
    %490 = vmatmul.mubr.f32.gmra.mxu0 %v423
    %v491 = vpop.f32.mrf.mxu0
    %v492 = vadd.f32 %v421, %v491
    %v493 = vpop.f32.mrf.mxu0
    %494 = vdwg.mxu0
    %495 = vst [vmem:[#allocation3] sm:$0x1] %v492
    // Predicated region
    $region38: #{tpu_custom_call.1} parent=1 // pred_check
      _
    $region39: #{tpu_custom_call.1} parent=1 // pred_check_branch
      %497 = sbr.rel (0) target = $region41
    $region40: #{tpu_custom_call.1} parent=1 // pred_region
      %s499 = ssub.s32 16, 16
      %500 = vsyncadd [#allocation4], %s499
      %s502 = sshll.u32 [#allocation3], 4
      %s503 = int_to_ptr.vmem [resolvable:$true] %s502
      %505 = dma.vmem_to_hbm [thread:$0]  %s503, 16, %s9, [#allocation4]
    $region41: #{tpu_custom_call.1} parent=1 // pred_fallthru
      _
    // Predicated region
    $region42: #{tpu_custom_call.1} parent=1 // pred_check
      _
    $region43: #{tpu_custom_call.1} parent=1 // pred_check_branch
      %507 = sbr.rel (0) target = $region45
    $region44: #{tpu_custom_call.1} parent=1 // pred_region
      %508 = dma.done [#allocation4], 16
    $region45: #{tpu_custom_call.1} parent=1 // pred_fallthru
      _
    %509 = vsyncpa [#allocation4], 1

</llo_original>
